<compile_context>
chip_gen: v5e
topology: v5e:2x2
jax: 0.10.0
libtpu: 0.0.40
codegen_flags: <defaults>
</compile_context>

<pallas_src>
import functools

import jax
import jax.numpy as jnp
from jax.experimental import pallas as pl
from jax.experimental.pallas import tpu as pltpu


def _round_up(x: int, m: int) -> int:
    return ((x + m - 1) // m) * m


# ---------------------------------------------------------------------------
# Kernel: one (tm, tn) output tile, accumulated in-place over the K grid axis.
# ---------------------------------------------------------------------------
def _encode_kernel(x_ref, w_ref, b_ref, o_ref):
    k = pl.program_id(2)

    # The output block index does not depend on k, so o_ref stays resident in
    # VMEM across the whole K loop -> accumulate directly into it.
    @pl.when(k == 0)
    def _():
        # Initialize with the bias (broadcast (1, tn) -> (tm, tn)).
        o_ref[...] = jnp.broadcast_to(b_ref[...], o_ref.shape)

    # bf16 x bf16 -> f32 on the MXU.
    o_ref[...] += jnp.dot(
        x_ref[...], w_ref[...], preferred_element_type=jnp.float32
    )


# ---------------------------------------------------------------------------
# One-time parameter preparation (transpose, pad to tile grid, cast to bf16).
# Do this at parameter-load time, NOT in the forward path.
# ---------------------------------------------------------------------------
def prepare_encode_params(weight, bias, *, tn=512, tk=2048):
    """weight: [H, F] (PyTorch layout), bias: [H].

    Returns (weight_t_padded_bf16 [Fp, Hp], bias2d_padded_f32 [1, Hp], tn, tk).
    """
    H, F = weight.shape
    assert bias.shape == (H,), bias.shape

    # Lane-dense tiles: multiples of 128, clamped to the padded problem size.
    tn = min(tn, _round_up(H, 128))
    tk = min(tk, _round_up(F, 128))
    Fp, Hp = _round_up(F, tk), _round_up(H, tn)

    w_t = jnp.asarray(weight, jnp.float32).T  # [F, H]
    if (Fp, Hp) != (F, H):
        w_t = jnp.pad(w_t, ((0, Fp - F), (0, Hp - H)))
    w_t = w_t.astype(jnp.bfloat16)

    b = jnp.asarray(bias, jnp.float32)
    if Hp != H:
        b = jnp.pad(b, (0, Hp - H))
    b2d = b.reshape(1, Hp)

    return w_t, b2d, tn, tk


def _choose_tm(B, tn, tk, *, budget_bytes=24 << 20, tm_cap=1024):
    """Pick tm: whole padded batch if the double-buffered VMEM budget allows."""
    x_bytes, w_bytes, o_bytes = 2, 2, 4  # bf16 x, bf16 w, f32 out

    def vmem(tm):
        return 2 * (tm * tk * x_bytes + tk * tn * w_bytes + tm * tn * o_bytes)

    Bp = _round_up(B, 8)
    if Bp <= tm_cap and vmem(Bp) <= budget_bytes:
        return Bp  # weight streams from HBM exactly once
    tm = tm_cap
    while tm > 8 and vmem(tm) > budget_bytes:
        tm //= 2
    return max(tm, 8)


# ---------------------------------------------------------------------------
# Forward pass.
# ---------------------------------------------------------------------------
@functools.partial(jax.jit, static_argnames=("num_hidden", "tn", "tk", "tm"))
def encode_layer(feats, weight_t, bias2d, *, num_hidden, tn, tk, tm=None):
    """Linear layer: feats @ W.T + b, with W pre-transposed/padded/bf16-cast.

    feats:    [..., F]   (any leading dims, like nn.Linear)
    weight_t: [Fp, Hp]   bfloat16 (from prepare_encode_params)
    bias2d:   [1, Hp]    float32
    returns:  [..., num_hidden]  float32
    """
    lead = feats.shape[:-1]
    F = feats.shape[-1]
    Fp, Hp = weight_t.shape
    H = num_hidden
    assert Fp % tk == 0 and Hp % tn == 0
    assert F <= Fp and H <= Hp

    x = feats.reshape(-1, F)
    B = x.shape[0]

    if tm is None:
        tm = _choose_tm(B, tn, tk)
    Bp = _round_up(B, tm)

    # Per-call padding of the (small) activation only; zero K-pad is benign.
    x = x.astype(jnp.bfloat16)
    if (Bp, Fp) != (B, F):
        x = jnp.pad(x, ((0, Bp - B), (0, Fp - F)))

    grid = (Bp // tm, Hp // tn, Fp // tk)

    # Explicit VMEM budget: double-buffered blocks + headroom, safe on all gens
    # (v5e scoped default is only 16 MiB; v7x physical is 64 MiB per TC).
    x_bytes, w_bytes, o_bytes = 2, 2, 4
    vmem_needed = 2 * (tm * tk * x_bytes + tk * tn * w_bytes + tn * 4
                       + tm * tn * o_bytes)
    vmem_limit = min(max(int(vmem_needed * 3 // 2) + (8 << 20), 32 << 20),
                     48 << 20)

    out_p = pl.pallas_call(
        _encode_kernel,
        out_shape=jax.ShapeDtypeStruct((Bp, Hp), jnp.float32),
        grid_spec=pltpu.PrefetchScalarGridSpec(
            num_scalar_prefetch=0,
            grid=grid,
            in_specs=[
                pl.BlockSpec((tm, tk), lambda i, j, k: (i, k)),   # x tile (bf16)
                pl.BlockSpec((tk, tn), lambda i, j, k: (k, j)),   # w tile (bf16)
                pl.BlockSpec((1, tn), lambda i, j, k: (0, j)),    # bias tile
            ],
            out_specs=pl.BlockSpec((tm, tn), lambda i, j, k: (i, j)),
        ),
        compiler_params=pltpu.CompilerParams(
            dimension_semantics=("parallel", "parallel", "arbitrary"),
            vmem_limit_bytes=vmem_limit,
        ),
        cost_estimate=pl.CostEstimate(
            flops=2 * B * F * H,
            transcendentals=0,
            # Actual streamed bytes: x re-read per N block, w re-read per M block.
            bytes_accessed=(x_bytes * Bp * Fp * (Hp // tn)
                            + w_bytes * Fp * Hp * (Bp // tm)
                            + o_bytes * Bp * Hp),
        ),
    )(x, weight_t, bias2d)

    out = out_p[:B, :H]
    return out.reshape(*lead, H)


if __name__ == "__main__":
    # Small shapes implied by the forward: feats is [batch, in_feats].
    batch, in_feats, num_hidden = 8, 16, 32

    key = jax.random.PRNGKey(0)
    k_x, k_w, k_b = jax.random.split(key, 3)

    # Deterministic "PyTorch-style" init: U(-1/sqrt(in_feats), 1/sqrt(in_feats)).
    bound = 1.0 / (in_feats ** 0.5)
    feats = jax.random.normal(k_x, (batch, in_feats), dtype=jnp.float32)
    weight = jax.random.uniform(k_w, (num_hidden, in_feats), dtype=jnp.float32,
                                minval=-bound, maxval=bound)
    bias = jax.random.uniform(k_b, (num_hidden,), dtype=jnp.float32,
                              minval=-bound, maxval=bound)

    # One-time parameter prep (transpose + pad + bf16) outside the forward path.
    weight_t, bias2d, tn, tk = prepare_encode_params(weight, bias)

    out = encode_layer(feats, weight_t, bias2d,
                       num_hidden=num_hidden, tn=tn, tk=tk)
    out = jax.block_until_ready(out)

    # Reference check against plain JAX f32 (same math as torch.nn.Linear).
    # bf16 MXU inputs with f32 accumulation -> loosened tolerance.
    ref = feats @ weight.T + bias
    assert out.shape == (batch, num_hidden)
    assert jnp.allclose(out, ref, atol=2e-2, rtol=2e-2), (
        float(jnp.max(jnp.abs(out - ref)))
    )

    print("KERNEL_OK")
</pallas_src>

<mosaic_0001>
module attributes {stable_mosaic.version = 11 : i64} {
  func.func @_encode_kernel(%arg0: i32, %arg1: i32, %arg2: i32, %arg3: memref<8x128xbf16, #tpu.memory_space<vmem>>, %arg4: memref<128x128xbf16, #tpu.memory_space<vmem>>, %arg5: memref<1x128xf32, #tpu.memory_space<vmem>>, %arg6: memref<8x128xf32, #tpu.memory_space<vmem>>) attributes {dimension_semantics = [#tpu.dimension_semantics<parallel>, #tpu.dimension_semantics<parallel>, #tpu.dimension_semantics<arbitrary>], iteration_bounds = array<i64: 1, 1, 1>, scalar_prefetch = 0 : i64, scratch_operands = 0 : i64, tpu.core_type = #tpu.core_type<tc>, window_params = [{transform_indices = @transform_0, window_bounds = array<i64: 8, 128>}, {transform_indices = @transform_1, window_bounds = array<i64: 128, 128>}, {transform_indices = @transform_2, window_bounds = array<i64: 1, 128>}, {transform_indices = @transform_3, window_bounds = array<i64: 8, 128>}]} {
    %c0_i32 = arith.constant 0 : i32
    %0 = arith.cmpi eq, %arg2, %c0_i32 : i32
    %1 = arith.extui %0 : i1 to i32
    %c0_i32_0 = arith.constant 0 : i32
    %2 = arith.cmpi ne, %1, %c0_i32_0 : i32
    scf.if %2 {
      %c0_8 = arith.constant 0 : index
      %c0_9 = arith.constant 0 : index
      %9 = vector.load %arg5[%c0_8, %c0_9] : memref<1x128xf32, #tpu.memory_space<vmem>>, vector<1x128xf32>
      %10 = vector.shape_cast %9 : vector<1x128xf32> to vector<1x128xf32>
      %11 = vector.broadcast %10 : vector<1x128xf32> to vector<8x128xf32>
      %c0_10 = arith.constant 0 : index
      %c0_11 = arith.constant 0 : index
      %12 = vector.load %arg6[%c0_10, %c0_11] : memref<8x128xf32, #tpu.memory_space<vmem>>, vector<8x128xf32>
      tpu.vector_store %arg6[%c0_10, %c0_11], %11 {strides = array<i32>} : memref<8x128xf32, #tpu.memory_space<vmem>>, vector<8x128xf32>,
    } else {
    }
    %c0 = arith.constant 0 : index
    %c0_1 = arith.constant 0 : index
    %3 = vector.load %arg6[%c0, %c0_1] : memref<8x128xf32, #tpu.memory_space<vmem>>, vector<8x128xf32>
    %c0_2 = arith.constant 0 : index
    %c0_3 = arith.constant 0 : index
    %4 = vector.load %arg3[%c0_2, %c0_3] : memref<8x128xbf16, #tpu.memory_space<vmem>>, vector<8x128xbf16>
    %c0_4 = arith.constant 0 : index
    %c0_5 = arith.constant 0 : index
    %5 = vector.load %arg4[%c0_4, %c0_5] : memref<128x128xbf16, #tpu.memory_space<vmem>>, vector<128x128xbf16>
    %cst = arith.constant dense<0.000000e+00> : vector<8x128xf32>
    %6 = tpu.matmul %4, %5, %cst {dimension_numbers = #tpu.dot_dimension_numbers<[1], [0], [0], [1], [0, 0, 1, 1], [], []>} : vector<8x128xbf16>, vector<128x128xbf16>, vector<8x128xf32> -> vector<8x128xf32>
    %7 = arith.addf %3, %6 : vector<8x128xf32>
    %c0_6 = arith.constant 0 : index
    %c0_7 = arith.constant 0 : index
    %8 = vector.load %arg6[%c0_6, %c0_7] : memref<8x128xf32, #tpu.memory_space<vmem>>, vector<8x128xf32>
    tpu.vector_store %arg6[%c0_6, %c0_7], %7 {strides = array<i32>} : memref<8x128xf32, #tpu.memory_space<vmem>>, vector<8x128xf32>,
    return
  }
  func.func @transform_0(%arg0: i32, %arg1: i32, %arg2: i32) -> (i32, i32) {
    %c0_i32 = arith.constant 0 : i32
    return %arg0, %arg2 : i32, i32
  }
  func.func @transform_1(%arg0: i32, %arg1: i32, %arg2: i32) -> (i32, i32) {
    %c0_i32 = arith.constant 0 : i32
    return %arg2, %arg1 : i32, i32
  }
  func.func @transform_2(%arg0: i32, %arg1: i32, %arg2: i32) -> (i32, i32) {
    %c0_i32 = arith.constant 0 : i32
    %c0_i32_0 = arith.constant 0 : i32
    return %c0_i32, %arg1 : i32, i32
  }
  func.func @transform_3(%arg0: i32, %arg1: i32, %arg2: i32) -> (i32, i32) {
    %c0_i32 = arith.constant 0 : i32
    return %arg0, %arg1 : i32, i32
  }
}

</mosaic_0001>

<llo_original>
// kernel: encode_layer.1
$region0: #{encode_layer.1}
  #allocation0 [shape = 'u32[]', space=smem, size = 0x4, offset = 0x4, fixed_abs, tag = 'smem constant byte address 0x4 - core index']
  #allocation1 [shape = 'u32[72,128]{1,0:T(1,128)}', space=vmem, size = 0x9000, scoped, tag = 'internal scratch']
  %s0 = inlined_call_operand.vmem [shape: bf16[8,128], index: 0, kind: input, shape index: {}]
  %s1 = inlined_call_operand.hbm [shape: bf16[128,128], index: 1, kind: input, shape index: {}]
  %s2 = inlined_call_operand.vmem [shape: f32[1,128], index: 2, kind: input, shape index: {}]
  %s3 = inlined_call_operand.hbm [shape: f32[8,128], index: 3, kind: output, shape index: {}]
  %s4 = sld [smem:[#allocation0]]
  $region30: #{encode_layer.1} parent=0
    _
  %s6 = ssub.s32 1, %s4
  %s7 = scalar_select 0, %s6, %s4
  $region1: #{encode_layer.1} parent=0
    #allocation2 [shape = 'u8[32768]{0}', space=vmem, size = 0x8000, scoped, tag = 'input window, operand 1, single buffered']
    #allocation3 [shape = 's32[1]{0}', space=sflag, size = 0x4, scoped, tag = 'scoped memory for encode_layer.1']
    #allocation4 [shape = 's32[1]{0}', space=sflag, size = 0x4, scoped, tag = 'scoped memory for encode_layer.1']
    #allocation5 [shape = 'u8[4096]{0}', space=vmem, size = 0x1000, scoped, tag = 'output window, operand 0, single buffered']
    %8 = vsyncpa [#allocation3], 0
    %9 = vsyncpa [#allocation4], 0
    // Predicated region
    $region2: #{encode_layer.1} parent=1 // pred_check
      _
    $region3: #{encode_layer.1} parent=1 // pred_check_branch
      %11 = sbr.rel (0) target = $region5
    $region4: #{encode_layer.1} parent=1 // pred_region
      _
    $region5: #{encode_layer.1} parent=1 // pred_fallthru
      _
    // Predicated region
    $region6: #{encode_layer.1} parent=1 // pred_check
      _
    $region7: #{encode_layer.1} parent=1 // pred_check_branch
      %13 = sbr.rel (0) target = $region9
    $region8: #{encode_layer.1} parent=1 // pred_region
      %15 = vsyncadd [#allocation3], 0
      %s16 = sshll.u32 %s1, 4
      %s17 = int_to_ptr.hbm [resolvable:$true] %s16
      %s18 = sshll.u32 [#allocation2], 4
      %s19 = int_to_ptr.vmem [resolvable:$true] %s18
      %24 = dma.hbm_to_vmem [thread:$0]  %s17, 1024, %s19, [#allocation3], 64, 64, 4
    $region9: #{encode_layer.1} parent=1 // pred_fallthru
      _
    // Predicated region
    $region10: #{encode_layer.1} parent=1 // pred_check
      _
    $region11: #{encode_layer.1} parent=1 // pred_check_branch
      %26 = sbr.rel (0) target = $region13
    $region12: #{encode_layer.1} parent=1 // pred_region
      _
    $region13: #{encode_layer.1} parent=1 // pred_fallthru
      _
    // Predicated region
    $region14: #{encode_layer.1} parent=1 // pred_check
      _
    $region15: #{encode_layer.1} parent=1 // pred_check_branch
      %28 = sbr.rel (0) target = $region17
    $region16: #{encode_layer.1} parent=1 // pred_region
      %30 = dma.done [#allocation3], 1024
    $region17: #{encode_layer.1} parent=1 // pred_fallthru
      _
    %p31 = scmp.eq.s32.totalorder 0, 0
    // Predicated region
    $region18: #{encode_layer.1} parent=1 // pred_check
      %p32 = pneg %p31
    $region19: #{encode_layer.1} parent=1 // pred_check_branch
      %34 = sbr.rel (%p32) target = $region21
    $region20: #{encode_layer.1} parent=1 // pred_region
      %v35 = vld [vmem:[%s2] sm:$0x1]
      %v37 = vperm.slane %v35, 0
      %39 = vst [vmem:[#allocation5] sm:$0xff] %v37
    $region21: #{encode_layer.1} parent=1 // pred_fallthru
      _
    %v40 = vld [vmem:[#allocation5] sm:$0xff]
    %v41 = vld [vmem:[%s0] sm:$0xf]
    %v42 = vld [vmem:[#allocation2] sm:$0xf]
    %v43 = vld [vmem:[#allocation2 + $0x4] sm:$0xf]
    %v44 = vld [vmem:[#allocation2 + $0x8] sm:$0xf]
    %v45 = vld [vmem:[#allocation2 + $0xc] sm:$0xf]
    %v46 = vld [vmem:[#allocation2 + $0x10] sm:$0xf]
    %v47 = vld [vmem:[#allocation2 + $0x14] sm:$0xf]
    %v48 = vld [vmem:[#allocation2 + $0x18] sm:$0xf]
    %v49 = vld [vmem:[#allocation2 + $0x1c] sm:$0xf]
    %v50 = vld [vmem:[#allocation2 + $0x20] sm:$0xf]
    %v51 = vld [vmem:[#allocation2 + $0x24] sm:$0xf]
    %v52 = vld [vmem:[#allocation2 + $0x28] sm:$0xf]
    %v53 = vld [vmem:[#allocation2 + $0x2c] sm:$0xf]
    %v54 = vld [vmem:[#allocation2 + $0x30] sm:$0xf]
    %v55 = vld [vmem:[#allocation2 + $0x34] sm:$0xf]
    %v56 = vld [vmem:[#allocation2 + $0x38] sm:$0xf]
    %v57 = vld [vmem:[#allocation2 + $0x3c] sm:$0xf]
    %v74 = vunpack.c.l.b16 %v42
    %v75 = vunpack.c.l.b16 %v43
    %v76 = vunpack.c.l.b16 %v44
    %v77 = vunpack.c.l.b16 %v45
    %v78 = vunpack.c.l.b16 %v46
    %v79 = vunpack.c.l.b16 %v47
    %v80 = vunpack.c.l.b16 %v48
    %v81 = vunpack.c.l.b16 %v49
    %v82 = vunpack.c.l.b16 %v50
    %v83 = vunpack.c.l.b16 %v51
    %v84 = vunpack.c.l.b16 %v52
    %v85 = vunpack.c.l.b16 %v53
    %v86 = vunpack.c.l.b16 %v54
    %v87 = vunpack.c.l.b16 %v55
    %v88 = vunpack.c.l.b16 %v56
    %v89 = vunpack.c.l.b16 %v57
    %v90 = vpack.c.b16 %v75, %v74
    %v91 = vpack.c.b16 %v77, %v76
    %v92 = vpack.c.b16 %v79, %v78
    %v93 = vpack.c.b16 %v81, %v80
    %v94 = vpack.c.b16 %v83, %v82
    %v95 = vpack.c.b16 %v85, %v84
    %v96 = vpack.c.b16 %v87, %v86
    %v97 = vpack.c.b16 %v89, %v88
    %106 = vmatpush.bf16.msra.mxu0 %v97
    %107 = vmatpush.bf16.msra.mxu0 %v96
    %108 = vmatpush.bf16.msra.mxu0 %v95
    %109 = vmatpush.bf16.msra.mxu0 %v94
    %110 = vmatpush.bf16.msra.mxu0 %v93
    %111 = vmatpush.bf16.msra.mxu0 %v92
    %112 = vmatpush.bf16.msra.mxu0 %v91
    %113 = vmatpush.bf16.msra.mxu0 %v90
    %114 = vmatmul.bf16.gmra.mxu0 %v41
    %v115 = vpop.f32.mrf.mxu0
    %v116 = vadd.f32 0.0, %v115
    %v117 = vpop.f32.mrf.mxu0
    %118 = vdwg.mxu0
    %v119 = vadd.f32 %v40, %v116
    %120 = vst [vmem:[#allocation5] sm:$0xff] %v119
    // Predicated region
    $region22: #{encode_layer.1} parent=1 // pred_check
      _
    $region23: #{encode_layer.1} parent=1 // pred_check_branch
      %122 = sbr.rel (0) target = $region25
    $region24: #{encode_layer.1} parent=1 // pred_region
      %124 = vsyncadd [#allocation4], 0
      %s126 = sshll.u32 [#allocation5], 4
      %s127 = int_to_ptr.vmem [resolvable:$true] %s126
      %s128 = sshll.u32 %s3, 4
      %s129 = int_to_ptr.hbm [resolvable:$true] %s128
      %131 = dma.vmem_to_hbm [thread:$0]  %s127, 128, %s129, [#allocation4]
    $region25: #{encode_layer.1} parent=1 // pred_fallthru
      _
    // Predicated region
    $region26: #{encode_layer.1} parent=1 // pred_check
      _
    $region27: #{encode_layer.1} parent=1 // pred_check_branch
      %133 = sbr.rel (0) target = $region29
    $region28: #{encode_layer.1} parent=1 // pred_region
      %135 = dma.done [#allocation4], 128
    $region29: #{encode_layer.1} parent=1 // pred_fallthru
      _
    %136 = vsyncpa [#allocation3], 1
    %137 = vsyncpa [#allocation4], 1

</llo_original>
